<compile_context>
chip_gen: v6e
topology: v6e:2x2x1
jax: 0.10.0
libtpu: 0.0.40
codegen_flags: <defaults>
</compile_context>

<pallas_src>
import jax
import jax.numpy as jnp
from jax.experimental import pallas as pl
from jax.experimental.pallas import tpu as pltpu


LANE = 128  # vreg lane width


def linear_sigmoid_kernel(w_ref, b_ref, xt_ref, o_ref):
    """sigmoid(x @ W^T + b), batch on the (sublane, lane) axes.

    w_ref : SMEM (OUT, IN)      f32 scalars
    b_ref : SMEM (OUT,)         f32 scalars
    xt_ref: VMEM (IN, RT, 128)  f32
    o_ref : VMEM (OUT, RT, 128) f32
    """
    in_features = xt_ref.shape[0]
    out_features = o_ref.shape[0]

    for o in range(out_features):               # static unroll (OUT = 2)
        # Reload x rows per output: keeps vreg live ranges short (no spill
        # risk at large RT); the kernel is DMA-bound, so the extra VMEM->vreg
        # loads are free filler.
        z = xt_ref[0] * w_ref[o, 0]             # (RT, 128) VPU broadcast-mul
        for i in range(1, in_features):         # static unroll (IN = 4)
            z = z + xt_ref[i] * w_ref[o, i]
        z = z + b_ref[o]
        # sigmoid(z) = 1 / (1 + exp(-z)); exp rides the EUP slot.
        # (approx reciprocal skipped: its ~2^-12 error would trip the 1e-5
        #  self-test tolerance and the kernel is HBM-bound anyway.)
        o_ref[o] = pl.reciprocal(1.0 + jnp.exp(-z), approx=False)


def _batch_dim_semantics():
    # v7x has 2 TensorCores per chip: shard the batch grid axis across them.
    # Other generations use the plain (near-zero-cost) "parallel" hint.
    try:
        kind = jax.devices()[0].device_kind.lower()
    except Exception:
        kind = ""
    if "v7" in kind:
        return (pltpu.CORE_PARALLEL,)
    return ("parallel",)


def linear_sigmoid(x, weight, bias, *, max_rows_per_tile=1024):
    """x: [B, IN], weight: [OUT, IN], bias: [OUT] -> sigmoid(x @ weight.T + bias)."""
    # Mirrors `x.to(torch.float32)` from the PyTorch module.
    x = x.astype(jnp.float32)
    weight = weight.astype(jnp.float32)
    bias = bias.astype(jnp.float32)

    B, IN = x.shape
    OUT = weight.shape[0]

    rows = pl.cdiv(B, LANE)            # batch packed as (rows, 128)
    B_pad = rows * LANE

    # Row-axis tiling:
    #  * small batches  -> one full-extent block (always legal),
    #  * large batches  -> (8,128)-aligned tiles of <= max_rows_per_tile rows
    #    (~2 MiB of x per block at the default), sized for >= ~4 grid steps so
    #    the DMA pipeline (and v7x's second core) has work; the ragged last
    #    tile is handled by Pallas instead of padding B up to a tile multiple.
    if rows <= 8:
        rows_tile = rows
    else:
        rows_tile = min(max_rows_per_tile, ((pl.cdiv(rows, 4) + 7) // 8) * 8)
    grid_rows = pl.cdiv(rows, rows_tile)

    # Single fused layout pass: [B, IN] -> (IN, rows, 128). Batch lands on the
    # (sublane, lane) axes so both input and output DMAs move dense tiles.
    if B_pad != B:
        x = jnp.pad(x, ((0, B_pad - B), (0, 0)))
    xt3 = x.reshape(rows, LANE, IN).transpose(2, 0, 1)

    cost = pl.CostEstimate(
        flops=2 * B_pad * IN * OUT + 3 * B_pad * OUT,
        transcendentals=B_pad * OUT,
        bytes_accessed=(IN + OUT) * 4 * B_pad + (IN + 1) * OUT * 4,
    )

    out3 = pl.pallas_call(
        linear_sigmoid_kernel,
        out_shape=jax.ShapeDtypeStruct((OUT, rows, LANE), jnp.float32),
        grid_spec=pl.GridSpec(
            grid=(grid_rows,),
            in_specs=[
                pl.BlockSpec(memory_space=pltpu.MemorySpace.SMEM),   # weight
                pl.BlockSpec(memory_space=pltpu.MemorySpace.SMEM),   # bias
                pl.BlockSpec((IN, rows_tile, LANE), lambda r: (0, r, 0)),
            ],
            out_specs=pl.BlockSpec((OUT, rows_tile, LANE), lambda r: (0, r, 0)),
        ),
        compiler_params=pltpu.CompilerParams(
            dimension_semantics=_batch_dim_semantics(),
            vmem_limit_bytes=32 * 1024 * 1024,
        ),
        cost_estimate=cost,
    )(weight, bias, xt3)

    # Back to the module's [B, OUT] interface (one fused transpose + slice).
    # TODO(synk): if the consumer can take (OUT, rows, 128), drop this pass.
    return out3.transpose(1, 2, 0).reshape(B_pad, OUT)[:B]


if __name__ == "__main__":
    key = jax.random.PRNGKey(0)
    kx, kw, kb = jax.random.split(key, 3)

    B, IN, OUT = 8, 4, 2

    # Deterministic parameter init mirroring nn.Linear(4, 2):
    # weight: [OUT, IN], bias: [OUT], uniform(-1/sqrt(IN), 1/sqrt(IN)).
    bound = 1.0 / jnp.sqrt(jnp.float32(IN))
    weight = jax.random.uniform(kw, (OUT, IN), jnp.float32, -bound, bound)
    bias = jax.random.uniform(kb, (OUT,), jnp.float32, -bound, bound)

    x = jax.random.normal(kx, (B, IN), jnp.float32)

    out = linear_sigmoid(x, weight, bias)
    jax.block_until_ready(out)

    # Reference check in plain JAX (same math as the PyTorch forward).
    ref = jax.nn.sigmoid(x @ weight.T + bias)
    assert out.shape == (B, OUT)
    assert jnp.allclose(out, ref, atol=1e-5, rtol=1e-5)

    print("KERNEL_OK")
</pallas_src>

<mosaic_0001>
module attributes {stable_mosaic.version = 11 : i64} {
  func.func @linear_sigmoid_kernel(%arg0: i32, %arg1: memref<2x4xf32, #tpu.memory_space<smem>>, %arg2: memref<2xf32, #tpu.memory_space<smem>>, %arg3: memref<4x1x128xf32, #tpu.memory_space<vmem>>, %arg4: memref<2x1x128xf32, #tpu.memory_space<vmem>>) attributes {dimension_semantics = [#tpu.dimension_semantics<parallel>], iteration_bounds = array<i64: 1>, scalar_prefetch = 0 : i64, scratch_operands = 0 : i64, tpu.core_type = #tpu.core_type<tc>, window_params = [{transform_indices = @transform_0, window_bounds = array<i64: 2, 4>}, {transform_indices = @transform_1, window_bounds = array<i64: 2>}, {transform_indices = @transform_2, window_bounds = array<i64: 4, 1, 128>}, {transform_indices = @transform_3, window_bounds = array<i64: 2, 1, 128>}]} {
    %c0 = arith.constant 0 : index
    %c0_0 = arith.constant 0 : index
    %c0_1 = arith.constant 0 : index
    %0 = vector.load %arg3[%c0, %c0_0, %c0_1] : memref<4x1x128xf32, #tpu.memory_space<vmem>>, vector<1x1x128xf32>
    %1 = vector.shape_cast %0 : vector<1x1x128xf32> to vector<1x128xf32>
    %c0_2 = arith.constant 0 : index
    %c0_3 = arith.constant 0 : index
    %2 = memref.load %arg1[%c0_2, %c0_3] : memref<2x4xf32, #tpu.memory_space<smem>>
    %3 = vector.broadcast %2 : f32 to vector<1x128xf32>
    %4 = arith.mulf %1, %3 : vector<1x128xf32>
    %c1 = arith.constant 1 : index
    %c0_4 = arith.constant 0 : index
    %c0_5 = arith.constant 0 : index
    %5 = vector.load %arg3[%c1, %c0_4, %c0_5] : memref<4x1x128xf32, #tpu.memory_space<vmem>>, vector<1x1x128xf32>
    %6 = vector.shape_cast %5 : vector<1x1x128xf32> to vector<1x128xf32>
    %c0_6 = arith.constant 0 : index
    %c1_7 = arith.constant 1 : index
    %7 = memref.load %arg1[%c0_6, %c1_7] : memref<2x4xf32, #tpu.memory_space<smem>>
    %8 = vector.broadcast %7 : f32 to vector<1x128xf32>
    %9 = arith.mulf %6, %8 : vector<1x128xf32>
    %10 = arith.addf %4, %9 : vector<1x128xf32>
    %c2 = arith.constant 2 : index
    %c0_8 = arith.constant 0 : index
    %c0_9 = arith.constant 0 : index
    %11 = vector.load %arg3[%c2, %c0_8, %c0_9] : memref<4x1x128xf32, #tpu.memory_space<vmem>>, vector<1x1x128xf32>
    %12 = vector.shape_cast %11 : vector<1x1x128xf32> to vector<1x128xf32>
    %c0_10 = arith.constant 0 : index
    %c2_11 = arith.constant 2 : index
    %13 = memref.load %arg1[%c0_10, %c2_11] : memref<2x4xf32, #tpu.memory_space<smem>>
    %14 = vector.broadcast %13 : f32 to vector<1x128xf32>
    %15 = arith.mulf %12, %14 : vector<1x128xf32>
    %16 = arith.addf %10, %15 : vector<1x128xf32>
    %c3 = arith.constant 3 : index
    %c0_12 = arith.constant 0 : index
    %c0_13 = arith.constant 0 : index
    %17 = vector.load %arg3[%c3, %c0_12, %c0_13] : memref<4x1x128xf32, #tpu.memory_space<vmem>>, vector<1x1x128xf32>
    %18 = vector.shape_cast %17 : vector<1x1x128xf32> to vector<1x128xf32>
    %c0_14 = arith.constant 0 : index
    %c3_15 = arith.constant 3 : index
    %19 = memref.load %arg1[%c0_14, %c3_15] : memref<2x4xf32, #tpu.memory_space<smem>>
    %20 = vector.broadcast %19 : f32 to vector<1x128xf32>
    %21 = arith.mulf %18, %20 : vector<1x128xf32>
    %22 = arith.addf %16, %21 : vector<1x128xf32>
    %c0_16 = arith.constant 0 : index
    %23 = memref.load %arg2[%c0_16] : memref<2xf32, #tpu.memory_space<smem>>
    %24 = vector.broadcast %23 : f32 to vector<1x128xf32>
    %25 = arith.addf %22, %24 : vector<1x128xf32>
    %cst = arith.constant 0.000000e+00 : f32
    %26 = vector.broadcast %cst : f32 to vector<1x128xf32>
    %27 = arith.subf %26, %25 : vector<1x128xf32>
    %28 = math.exp %27 : vector<1x128xf32>
    %cst_17 = arith.constant 1.000000e+00 : f32
    %29 = vector.broadcast %cst_17 : f32 to vector<1x128xf32>
    %30 = arith.addf %29, %28 : vector<1x128xf32>
    %31 = tpu.reciprocal %30 : vector<1x128xf32> -> vector<1x128xf32>
    %c0_18 = arith.constant 0 : index
    %c0_19 = arith.constant 0 : index
    %c0_20 = arith.constant 0 : index
    %32 = vector.load %arg4[%c0_18, %c0_19, %c0_20] : memref<2x1x128xf32, #tpu.memory_space<vmem>>, vector<1x1x128xf32>
    %33 = vector.shape_cast %32 : vector<1x1x128xf32> to vector<1x128xf32>
    %34 = vector.shape_cast %31 : vector<1x128xf32> to vector<1x1x128xf32>
    tpu.vector_store %arg4[%c0_18, %c0_19, %c0_20], %34 {strides = array<i32>} : memref<2x1x128xf32, #tpu.memory_space<vmem>>, vector<1x1x128xf32>,
    %c0_21 = arith.constant 0 : index
    %c0_22 = arith.constant 0 : index
    %c0_23 = arith.constant 0 : index
    %35 = vector.load %arg3[%c0_21, %c0_22, %c0_23] : memref<4x1x128xf32, #tpu.memory_space<vmem>>, vector<1x1x128xf32>
    %36 = vector.shape_cast %35 : vector<1x1x128xf32> to vector<1x128xf32>
    %c1_24 = arith.constant 1 : index
    %c0_25 = arith.constant 0 : index
    %37 = memref.load %arg1[%c1_24, %c0_25] : memref<2x4xf32, #tpu.memory_space<smem>>
    %38 = vector.broadcast %37 : f32 to vector<1x128xf32>
    %39 = arith.mulf %36, %38 : vector<1x128xf32>
    %c1_26 = arith.constant 1 : index
    %c0_27 = arith.constant 0 : index
    %c0_28 = arith.constant 0 : index
    %40 = vector.load %arg3[%c1_26, %c0_27, %c0_28] : memref<4x1x128xf32, #tpu.memory_space<vmem>>, vector<1x1x128xf32>
    %41 = vector.shape_cast %40 : vector<1x1x128xf32> to vector<1x128xf32>
    %c1_29 = arith.constant 1 : index
    %c1_30 = arith.constant 1 : index
    %42 = memref.load %arg1[%c1_29, %c1_30] : memref<2x4xf32, #tpu.memory_space<smem>>
    %43 = vector.broadcast %42 : f32 to vector<1x128xf32>
    %44 = arith.mulf %41, %43 : vector<1x128xf32>
    %45 = arith.addf %39, %44 : vector<1x128xf32>
    %c2_31 = arith.constant 2 : index
    %c0_32 = arith.constant 0 : index
    %c0_33 = arith.constant 0 : index
    %46 = vector.load %arg3[%c2_31, %c0_32, %c0_33] : memref<4x1x128xf32, #tpu.memory_space<vmem>>, vector<1x1x128xf32>
    %47 = vector.shape_cast %46 : vector<1x1x128xf32> to vector<1x128xf32>
    %c1_34 = arith.constant 1 : index
    %c2_35 = arith.constant 2 : index
    %48 = memref.load %arg1[%c1_34, %c2_35] : memref<2x4xf32, #tpu.memory_space<smem>>
    %49 = vector.broadcast %48 : f32 to vector<1x128xf32>
    %50 = arith.mulf %47, %49 : vector<1x128xf32>
    %51 = arith.addf %45, %50 : vector<1x128xf32>
    %c3_36 = arith.constant 3 : index
    %c0_37 = arith.constant 0 : index
    %c0_38 = arith.constant 0 : index
    %52 = vector.load %arg3[%c3_36, %c0_37, %c0_38] : memref<4x1x128xf32, #tpu.memory_space<vmem>>, vector<1x1x128xf32>
    %53 = vector.shape_cast %52 : vector<1x1x128xf32> to vector<1x128xf32>
    %c1_39 = arith.constant 1 : index
    %c3_40 = arith.constant 3 : index
    %54 = memref.load %arg1[%c1_39, %c3_40] : memref<2x4xf32, #tpu.memory_space<smem>>
    %55 = vector.broadcast %54 : f32 to vector<1x128xf32>
    %56 = arith.mulf %53, %55 : vector<1x128xf32>
    %57 = arith.addf %51, %56 : vector<1x128xf32>
    %c1_41 = arith.constant 1 : index
    %58 = memref.load %arg2[%c1_41] : memref<2xf32, #tpu.memory_space<smem>>
    %59 = vector.broadcast %58 : f32 to vector<1x128xf32>
    %60 = arith.addf %57, %59 : vector<1x128xf32>
    %cst_42 = arith.constant 0.000000e+00 : f32
    %61 = vector.broadcast %cst_42 : f32 to vector<1x128xf32>
    %62 = arith.subf %61, %60 : vector<1x128xf32>
    %63 = math.exp %62 : vector<1x128xf32>
    %cst_43 = arith.constant 1.000000e+00 : f32
    %64 = vector.broadcast %cst_43 : f32 to vector<1x128xf32>
    %65 = arith.addf %64, %63 : vector<1x128xf32>
    %66 = tpu.reciprocal %65 : vector<1x128xf32> -> vector<1x128xf32>
    %c1_44 = arith.constant 1 : index
    %c0_45 = arith.constant 0 : index
    %c0_46 = arith.constant 0 : index
    %67 = vector.load %arg4[%c1_44, %c0_45, %c0_46] : memref<2x1x128xf32, #tpu.memory_space<vmem>>, vector<1x1x128xf32>
    %68 = vector.shape_cast %67 : vector<1x1x128xf32> to vector<1x128xf32>
    %69 = vector.shape_cast %66 : vector<1x128xf32> to vector<1x1x128xf32>
    tpu.vector_store %arg4[%c1_44, %c0_45, %c0_46], %69 {strides = array<i32>} : memref<2x1x128xf32, #tpu.memory_space<vmem>>, vector<1x1x128xf32>,
    return
  }
  func.func @transform_0(%arg0: i32) -> (i32, i32) {
    %c0_i32 = arith.constant 0 : i32
    %c0_i32_0 = arith.constant 0 : i32
    %c0_i32_1 = arith.constant 0 : i32
    return %c0_i32, %c0_i32_0 : i32, i32
  }
  func.func @transform_1(%arg0: i32) -> i32 {
    %c0_i32 = arith.constant 0 : i32
    %c0_i32_0 = arith.constant 0 : i32
    return %c0_i32 : i32
  }
  func.func @transform_2(%arg0: i32) -> (i32, i32, i32) {
    %c0_i32 = arith.constant 0 : i32
    %c0_i32_0 = arith.constant 0 : i32
    %c0_i32_1 = arith.constant 0 : i32
    return %c0_i32, %arg0, %c0_i32_0 : i32, i32, i32
  }
  func.func @transform_3(%arg0: i32) -> (i32, i32, i32) {
    %c0_i32 = arith.constant 0 : i32
    %c0_i32_0 = arith.constant 0 : i32
    %c0_i32_1 = arith.constant 0 : i32
    return %c0_i32, %arg0, %c0_i32_0 : i32, i32, i32
  }
}

</mosaic_0001>

<llo_original>
// kernel: tpu_custom_call.1
$region0: #{tpu_custom_call.1}
  #allocation0 [shape = 'u32[]', space=smem, size = 0x4, offset = 0x4, fixed_abs, tag = 'smem constant byte address 0x4 - core index']
  #allocation1 [shape = 'u32[144,128]{1,0:T(1,128)}', space=vmem, size = 0x12000, scoped, tag = 'internal scratch']
  %s0 = inlined_call_operand.hbm [shape: f32[2,4], index: 0, kind: input, shape index: {}]
  %s1 = inlined_call_operand.vmem [shape: f32[2], index: 1, kind: input, shape index: {}]
  %s2 = inlined_call_operand.hbm [shape: f32[4,1,128], index: 2, kind: input, shape index: {}]
  %s3 = inlined_call_operand.hbm [shape: f32[2,1,128], index: 3, kind: output, shape index: {}]
  %s4 = sld [smem:[#allocation0]]
  $region34: #{tpu_custom_call.1} parent=0
    _
  %s6 = ssub.s32 1, %s4
  %s7 = scalar_select 0, %s6, %s4
  $region1: #{tpu_custom_call.1} parent=0
    #allocation2 [shape = 'u8[1024]{0}', space=smem, size = 0x400, scoped, tag = 'input window, operand 0, single buffered']
    #allocation3 [shape = 's32[1]{0}', space=sflag, size = 0x4, scoped, tag = 'scoped memory for tpu_custom_call.1']
    #allocation4 [shape = 's32[1]{0}', space=sflag, size = 0x4, scoped, tag = 'scoped memory for tpu_custom_call.1']
    #allocation5 [shape = 's32[1]{0}', space=sflag, size = 0x4, scoped, tag = 'scoped memory for tpu_custom_call.1']
    #allocation6 [shape = 's32[1]{0}', space=sflag, size = 0x4, scoped, tag = 'scoped memory for tpu_custom_call.1']
    #allocation7 [shape = 'u8[512]{0}', space=smem, size = 0x200, scoped, tag = 'input window, operand 1, single buffered']
    #allocation8 [shape = 'u8[2048]{0}', space=vmem, size = 0x800, scoped, tag = 'input window, operand 2, single buffered']
    #allocation9 [shape = 'u8[1024]{0}', space=vmem, size = 0x400, scoped, tag = 'output window, operand 0, single buffered']
    %8 = vsyncpa [#allocation5], 0
    %9 = vsyncpa [#allocation6], 0
    %10 = vsyncpa [#allocation3], 0
    %11 = vsyncpa [#allocation4], 0
    // Predicated region
    $region2: #{tpu_custom_call.1} parent=1 // pred_check
      _
    $region3: #{tpu_custom_call.1} parent=1 // pred_check_branch
      %13 = sbr.rel (0) target = $region5
    $region4: #{tpu_custom_call.1} parent=1 // pred_region
      %s15 = ssub.s32 32, 32
      %16 = vsyncadd [#allocation5], %s15
      %19 = dma.hbm_to_smem %s0, 32, [#allocation2], [#allocation5]
    $region5: #{tpu_custom_call.1} parent=1 // pred_fallthru
      _
    // Predicated region
    $region6: #{tpu_custom_call.1} parent=1 // pred_check
      _
    $region7: #{tpu_custom_call.1} parent=1 // pred_check_branch
      %21 = sbr.rel (0) target = $region9
    $region8: #{tpu_custom_call.1} parent=1 // pred_region
      %s23 = ssub.s32 16, 16
      %24 = vsyncadd [#allocation6], %s23
      %s26 = sshll.u32 %s1, 4
      %s27 = int_to_ptr.vmem [resolvable:$true] %s26
      %29 = dma.vmem_to_smem %s27, 16, [#allocation7], [#allocation6]
    $region9: #{tpu_custom_call.1} parent=1 // pred_fallthru
      _
    // Predicated region
    $region10: #{tpu_custom_call.1} parent=1 // pred_check
      _
    $region11: #{tpu_custom_call.1} parent=1 // pred_check_branch
      %31 = sbr.rel (0) target = $region13
    $region12: #{tpu_custom_call.1} parent=1 // pred_region
      %s33 = ssub.s32 64, 64
      %34 = vsyncadd [#allocation3], %s33
      %s35 = sshll.u32 [#allocation8], 4
      %s36 = int_to_ptr.vmem [resolvable:$true] %s35
      %41 = dma.hbm_to_vmem [thread:$0]  %s2, 64, %s36, [#allocation3], 16, 16, 1
    $region13: #{tpu_custom_call.1} parent=1 // pred_fallthru
      _
    // Predicated region
    $region14: #{tpu_custom_call.1} parent=1 // pred_check
      _
    $region15: #{tpu_custom_call.1} parent=1 // pred_check_branch
      %43 = sbr.rel (0) target = $region17
    $region16: #{tpu_custom_call.1} parent=1 // pred_region
      %44 = dma.done [#allocation5], 32
    $region17: #{tpu_custom_call.1} parent=1 // pred_fallthru
      _
    // Predicated region
    $region18: #{tpu_custom_call.1} parent=1 // pred_check
      _
    $region19: #{tpu_custom_call.1} parent=1 // pred_check_branch
      %46 = sbr.rel (0) target = $region21
    $region20: #{tpu_custom_call.1} parent=1 // pred_region
      %47 = dma.done [#allocation6], 16
    $region21: #{tpu_custom_call.1} parent=1 // pred_fallthru
      _
    // Predicated region
    $region22: #{tpu_custom_call.1} parent=1 // pred_check
      _
    $region23: #{tpu_custom_call.1} parent=1 // pred_check_branch
      %49 = sbr.rel (0) target = $region25
    $region24: #{tpu_custom_call.1} parent=1 // pred_region
      %50 = dma.done [#allocation3], 64
    $region25: #{tpu_custom_call.1} parent=1 // pred_fallthru
      _
    %51 = sfence
    %v52 = vld [vmem:[#allocation8] sm:$0x1]
    %s53 = sld [smem:[#allocation2]]
    %v54 = vstv %s53
    %v55 = vmul.f32 %v52, %v54
    %s56 = scalar_lea.vmem [#allocation8], 1
    %v57 = vld [vmem:[%s56] sm:$0x1]
    %s58 = sld [smem:[#allocation2 + $0x1]]
    %v59 = vstv %s58
    %v60 = vmul.f32 %v57, %v59
    %v61 = vadd.f32 %v55, %v60
    %s62 = scalar_lea.vmem [#allocation8], 2
    %v63 = vld [vmem:[%s62] sm:$0x1]
    %s64 = sld [smem:[#allocation2 + $0x2]]
    %v65 = vstv %s64
    %v66 = vmul.f32 %v63, %v65
    %v67 = vadd.f32 %v61, %v66
    %s68 = scalar_lea.vmem [#allocation8], 3
    %v69 = vld [vmem:[%s68] sm:$0x1]
    %s70 = sld [smem:[#allocation2 + $0x3]]
    %v71 = vstv %s70
    %v72 = vmul.f32 %v69, %v71
    %v73 = vadd.f32 %v67, %v72
    %s74 = sld [smem:[#allocation7]]
    %v75 = vstv %s74
    %v76 = vadd.f32 %v73, %v75
    %v77 = vsub.f32 0.0, %v76
    %v78 = vmul.f32 %v77, 1.442695
    %v79 = vpow.pop %v78
    %v80 = vadd.f32 %v79, 1.0
    %v81 = vrcp.pop %v80
    %82 = vst [vmem:[#allocation9] sm:$0x1] %v81
    %v83 = vld [vmem:[#allocation8] sm:$0x1]
    %s84 = sld [smem:[#allocation2 + $0x80]]
    %v85 = vstv %s84
    %v86 = vmul.f32 %v83, %v85
    %v87 = vld [vmem:[%s56] sm:$0x1]
    %s88 = sld [smem:[#allocation2 + $0x81]]
    %v89 = vstv %s88
    %v90 = vmul.f32 %v87, %v89
    %v91 = vadd.f32 %v86, %v90
    %v92 = vld [vmem:[%s62] sm:$0x1]
    %s93 = sld [smem:[#allocation2 + $0x82]]
    %v94 = vstv %s93
    %v95 = vmul.f32 %v92, %v94
    %v96 = vadd.f32 %v91, %v95
    %v97 = vld [vmem:[%s68] sm:$0x1]
    %s98 = sld [smem:[#allocation2 + $0x83]]
    %v99 = vstv %s98
    %v100 = vmul.f32 %v97, %v99
    %v101 = vadd.f32 %v96, %v100
    %s102 = sld [smem:[#allocation7 + $0x1]]
    %v103 = vstv %s102
    %v104 = vadd.f32 %v101, %v103
    %v105 = vsub.f32 0.0, %v104
    %v106 = vmul.f32 %v105, 1.442695
    %v107 = vpow.pop %v106
    %v108 = vadd.f32 %v107, 1.0
    %v109 = vrcp.pop %v108
    %s110 = scalar_lea.vmem [#allocation9], 1
    %111 = vst [vmem:[%s110] sm:$0x1] %v109
    // Predicated region
    $region26: #{tpu_custom_call.1} parent=1 // pred_check
      _
    $region27: #{tpu_custom_call.1} parent=1 // pred_check_branch
      %113 = sbr.rel (0) target = $region29
    $region28: #{tpu_custom_call.1} parent=1 // pred_region
      %s115 = ssub.s32 32, 32
      %116 = vsyncadd [#allocation4], %s115
      %s117 = sshll.u32 [#allocation9], 4
      %s118 = int_to_ptr.vmem [resolvable:$true] %s117
      %123 = dma.vmem_to_hbm [thread:$0]  %s118, 32, %s3, [#allocation4], 16, 16, 1
    $region29: #{tpu_custom_call.1} parent=1 // pred_fallthru
      _
    // Predicated region
    $region30: #{tpu_custom_call.1} parent=1 // pred_check
      _
    $region31: #{tpu_custom_call.1} parent=1 // pred_check_branch
      %125 = sbr.rel (0) target = $region33
    $region32: #{tpu_custom_call.1} parent=1 // pred_region
      %126 = dma.done [#allocation4], 32
    $region33: #{tpu_custom_call.1} parent=1 // pred_fallthru
      _
    %127 = vsyncpa [#allocation3], 1
    %128 = vsyncpa [#allocation4], 1
    %129 = vsyncpa [#allocation5], 1
    %130 = vsyncpa [#allocation6], 1

</llo_original>
